<compile_context>
chip_gen: v6e
topology: v6e:2x2x1
jax: 0.10.0
libtpu: 0.0.40
codegen_flags: <defaults>
</compile_context>

<pallas_src>
import jax
import jax.numpy as jnp
from jax.experimental import pallas as pl
from jax.experimental.pallas import tpu as pltpu


def _dice_kernel(x_ref, t_ref, o_ref, inter_acc, x_acc, t_acc):
    k = pl.program_id(1)

    @pl.when(k == 0)
    def _():
        inter_acc[...] = jnp.zeros_like(inter_acc)
        x_acc[...] = jnp.zeros_like(x_acc)
        t_acc[...] = jnp.zeros_like(t_acc)

    x = x_ref[...].astype(jnp.float32)   # (tbc, g_chunk, 128)
    t = t_ref[...].astype(jnp.float32)

    # hot path: elementwise multiply + sublane-direction partial sums into
    # lane-dense (tbc, 128) accumulators (full-width VPU adds / stores)
    inter_acc[...] += jnp.sum(x * t, axis=1)
    x_acc[...] += jnp.sum(x, axis=1)
    t_acc[...] += jnp.sum(t, axis=1)

    @pl.when(k == pl.num_programs(1) - 1)
    def _():
        # single cross-lane reduction + divide, once per BC tile
        inter = jnp.sum(inter_acc[...], axis=1, keepdims=True)   # (tbc, 1)
        xs = jnp.sum(x_acc[...], axis=1, keepdims=True)
        ts = jnp.sum(t_acc[...], axis=1, keepdims=True)
        # no smoothing term: faithful to the PyTorch module (0/0 -> NaN there too)
        dice = 2.0 * inter / (xs + ts)
        o_ref[...] = dice[None, :, :].astype(o_ref.dtype)        # (1, tbc, 1)


def _round_up(x, m):
    return ((x + m - 1) // m) * m


def _vmem_capacity_bytes():
    try:
        return int(pltpu.get_tpu_info().vmem_capacity_bytes)
    except Exception:
        return 64 * 1024 * 1024   # conservative fallback (64 MiB-class parts)


def dice_loss(inputs, targets, channels=10):
    """inputs, targets: (B, C, D, H, W) arrays. Returns scalar f32 loss."""
    B, C, D, H, W = inputs.shape
    S = D * H * W
    BC = B * C

    # --- BC (row) tiling: two tiles on the "parallel" axis when possible so a
    #     2-TensorCore chip can stream rows on both cores; neutral on 1-TC chips.
    n_bc_tiles = 2 if BC % 2 == 0 else 1
    tbc = BC // n_bc_tiles

    # --- VMEM-budget-driven spatial chunk (~1-4 MiB per input block).
    vmem_cap = _vmem_capacity_bytes()
    itemsize = jnp.dtype(inputs.dtype).itemsize
    target_block_bytes = max(1 << 20, min(4 << 20, vmem_cap // 24))

    g_needed = pl.cdiv(S, 128)                 # 128-lane groups needed per row
    bytes_per_group = tbc * 128 * itemsize
    g_chunk = max(8, (target_block_bytes // bytes_per_group) // 8 * 8)
    g_chunk = min(g_chunk, _round_up(g_needed, 8))
    g_pad = _round_up(g_needed, g_chunk)       # padded groups per row
    S_pad = g_pad * 128
    n_g_chunks = g_pad // g_chunk

    x = inputs.reshape(BC, S)
    t = targets.reshape(BC, S)
    if S_pad != S:
        # zero padding is exact for all three sums
        x = jnp.pad(x, ((0, 0), (0, S_pad - S)))
        t = jnp.pad(t, ((0, 0), (0, S_pad - S)))
    x = x.reshape(BC, g_pad, 128)
    t = t.reshape(BC, g_pad, 128)

    # VMEM budget: 2 inputs x 2 pipeline buffers + headroom for f32 temporaries.
    block_bytes = tbc * g_chunk * 128 * itemsize
    block_f32 = tbc * g_chunk * 128 * 4
    vmem_need = 2 * 2 * block_bytes + 6 * block_f32 + (2 << 20)
    vmem_limit = int(min(max(vmem_need, 32 << 20), (vmem_cap * 3) // 4))

    out = pl.pallas_call(
        _dice_kernel,
        out_shape=jax.ShapeDtypeStruct((n_bc_tiles, tbc, 1), jnp.float32),
        grid_spec=pltpu.PrefetchScalarGridSpec(
            num_scalar_prefetch=0,
            grid=(n_bc_tiles, n_g_chunks),
            in_specs=[
                pl.BlockSpec((tbc, g_chunk, 128), lambda i, k: (i, k, 0)),
                pl.BlockSpec((tbc, g_chunk, 128), lambda i, k: (i, k, 0)),
            ],
            out_specs=pl.BlockSpec((1, tbc, 1), lambda i, k: (i, 0, 0)),
            scratch_shapes=[
                pltpu.VMEM((tbc, 128), jnp.float32),   # sum(x*t) partials
                pltpu.VMEM((tbc, 128), jnp.float32),   # sum(x) partials
                pltpu.VMEM((tbc, 128), jnp.float32),   # sum(t) partials
            ],
        ),
        compiler_params=pltpu.CompilerParams(
            dimension_semantics=("parallel", "arbitrary"),
            vmem_limit_bytes=vmem_limit,
        ),
    )(x, t)

    # tiny finalize in JAX: sum per-row dice, normalize like the PyTorch module
    dice_sum = jnp.sum(out)
    return (1.0 - dice_sum / float(channels * B)).astype(jnp.float32)


def dice_loss_ref(inputs, targets, channels=10):
    """Pure-JAX reference mirroring the PyTorch forward."""
    inter = jnp.sum(inputs * targets, axis=(2, 3, 4))
    dice = 2.0 * inter / (jnp.sum(inputs, axis=(2, 3, 4)) +
                          jnp.sum(targets, axis=(2, 3, 4)))
    dice = jnp.sum(dice) / (channels * inputs.shape[0])
    return 1.0 - dice


if __name__ == "__main__":
    key = jax.random.PRNGKey(0)
    k1, k2 = jax.random.split(key)

    B, C, D, H, W = 2, 4, 8, 8, 8          # small 3-D segmentation volumes
    channels = C                            # DiceLoss(channels=C)

    # soft probabilities / soft targets (strictly positive -> no 0/0)
    inputs = jax.random.uniform(k1, (B, C, D, H, W), dtype=jnp.float32)
    targets = jax.random.uniform(k2, (B, C, D, H, W), dtype=jnp.float32)

    out = dice_loss(inputs, targets, channels=channels)
    out = jax.block_until_ready(out)

    ref = dice_loss_ref(inputs, targets, channels=channels)
    assert jnp.allclose(out, ref, rtol=1e-5, atol=1e-5), (out, ref)

    print("KERNEL_OK")
</pallas_src>

<mosaic_0001>
module attributes {stable_mosaic.version = 11 : i64} {
  func.func @_dice_kernel(%arg0: i32, %arg1: i32, %arg2: memref<4x8x128xf32, #tpu.memory_space<vmem>>, %arg3: memref<4x8x128xf32, #tpu.memory_space<vmem>>, %arg4: memref<1x4x1xf32, #tpu.memory_space<vmem>>, %arg5: memref<4x128xf32, #tpu.memory_space<vmem>>, %arg6: memref<4x128xf32, #tpu.memory_space<vmem>>, %arg7: memref<4x128xf32, #tpu.memory_space<vmem>>) attributes {dimension_semantics = [#tpu.dimension_semantics<parallel>, #tpu.dimension_semantics<arbitrary>], iteration_bounds = array<i64: 2, 1>, scalar_prefetch = 0 : i64, scratch_operands = 3 : i64, tpu.core_type = #tpu.core_type<tc>, window_params = [{transform_indices = @transform_0, window_bounds = array<i64: 4, 8, 128>}, {transform_indices = @transform_1, window_bounds = array<i64: 4, 8, 128>}, {transform_indices = @transform_2, window_bounds = array<i64: 1, 4, 1>}]} {
    %c0_i32 = arith.constant 0 : i32
    %0 = arith.cmpi eq, %arg1, %c0_i32 : i32
    %1 = arith.extui %0 : i1 to i32
    %c0_i32_0 = arith.constant 0 : i32
    %2 = arith.cmpi ne, %1, %c0_i32_0 : i32
    scf.if %2 {
      %cst_22 = arith.constant 0.000000e+00 : f32
      %21 = vector.broadcast %cst_22 : f32 to vector<4x128xf32>
      %c0_23 = arith.constant 0 : index
      %c0_24 = arith.constant 0 : index
      %22 = vector.load %arg5[%c0_23, %c0_24] : memref<4x128xf32, #tpu.memory_space<vmem>>, vector<4x128xf32>
      tpu.vector_store %arg5[%c0_23, %c0_24], %21 {strides = array<i32>} : memref<4x128xf32, #tpu.memory_space<vmem>>, vector<4x128xf32>,
      %cst_25 = arith.constant 0.000000e+00 : f32
      %23 = vector.broadcast %cst_25 : f32 to vector<4x128xf32>
      %c0_26 = arith.constant 0 : index
      %c0_27 = arith.constant 0 : index
      %24 = vector.load %arg6[%c0_26, %c0_27] : memref<4x128xf32, #tpu.memory_space<vmem>>, vector<4x128xf32>
      tpu.vector_store %arg6[%c0_26, %c0_27], %23 {strides = array<i32>} : memref<4x128xf32, #tpu.memory_space<vmem>>, vector<4x128xf32>,
      %cst_28 = arith.constant 0.000000e+00 : f32
      %25 = vector.broadcast %cst_28 : f32 to vector<4x128xf32>
      %c0_29 = arith.constant 0 : index
      %c0_30 = arith.constant 0 : index
      %26 = vector.load %arg7[%c0_29, %c0_30] : memref<4x128xf32, #tpu.memory_space<vmem>>, vector<4x128xf32>
      tpu.vector_store %arg7[%c0_29, %c0_30], %25 {strides = array<i32>} : memref<4x128xf32, #tpu.memory_space<vmem>>, vector<4x128xf32>,
    } else {
    }
    %c0 = arith.constant 0 : index
    %c0_1 = arith.constant 0 : index
    %c0_2 = arith.constant 0 : index
    %3 = vector.load %arg2[%c0, %c0_1, %c0_2] : memref<4x8x128xf32, #tpu.memory_space<vmem>>, vector<4x8x128xf32>
    %c0_3 = arith.constant 0 : index
    %c0_4 = arith.constant 0 : index
    %c0_5 = arith.constant 0 : index
    %4 = vector.load %arg3[%c0_3, %c0_4, %c0_5] : memref<4x8x128xf32, #tpu.memory_space<vmem>>, vector<4x8x128xf32>
    %c0_6 = arith.constant 0 : index
    %c0_7 = arith.constant 0 : index
    %5 = vector.load %arg5[%c0_6, %c0_7] : memref<4x128xf32, #tpu.memory_space<vmem>>, vector<4x128xf32>
    %6 = arith.mulf %3, %4 : vector<4x8x128xf32>
    %cst = arith.constant dense<0.000000e+00> : vector<4x128xf32>
    %7 = vector.multi_reduction <add>, %6, %cst [1] : vector<4x8x128xf32> to vector<4x128xf32>
    %8 = arith.addf %5, %7 : vector<4x128xf32>
    %c0_8 = arith.constant 0 : index
    %c0_9 = arith.constant 0 : index
    %9 = vector.load %arg5[%c0_8, %c0_9] : memref<4x128xf32, #tpu.memory_space<vmem>>, vector<4x128xf32>
    tpu.vector_store %arg5[%c0_8, %c0_9], %8 {strides = array<i32>} : memref<4x128xf32, #tpu.memory_space<vmem>>, vector<4x128xf32>,
    %c0_10 = arith.constant 0 : index
    %c0_11 = arith.constant 0 : index
    %10 = vector.load %arg6[%c0_10, %c0_11] : memref<4x128xf32, #tpu.memory_space<vmem>>, vector<4x128xf32>
    %cst_12 = arith.constant dense<0.000000e+00> : vector<4x128xf32>
    %11 = vector.multi_reduction <add>, %3, %cst_12 [1] : vector<4x8x128xf32> to vector<4x128xf32>
    %12 = arith.addf %10, %11 : vector<4x128xf32>
    %c0_13 = arith.constant 0 : index
    %c0_14 = arith.constant 0 : index
    %13 = vector.load %arg6[%c0_13, %c0_14] : memref<4x128xf32, #tpu.memory_space<vmem>>, vector<4x128xf32>
    tpu.vector_store %arg6[%c0_13, %c0_14], %12 {strides = array<i32>} : memref<4x128xf32, #tpu.memory_space<vmem>>, vector<4x128xf32>,
    %c0_15 = arith.constant 0 : index
    %c0_16 = arith.constant 0 : index
    %14 = vector.load %arg7[%c0_15, %c0_16] : memref<4x128xf32, #tpu.memory_space<vmem>>, vector<4x128xf32>
    %cst_17 = arith.constant dense<0.000000e+00> : vector<4x128xf32>
    %15 = vector.multi_reduction <add>, %4, %cst_17 [1] : vector<4x8x128xf32> to vector<4x128xf32>
    %16 = arith.addf %14, %15 : vector<4x128xf32>
    %c0_18 = arith.constant 0 : index
    %c0_19 = arith.constant 0 : index
    %17 = vector.load %arg7[%c0_18, %c0_19] : memref<4x128xf32, #tpu.memory_space<vmem>>, vector<4x128xf32>
    tpu.vector_store %arg7[%c0_18, %c0_19], %16 {strides = array<i32>} : memref<4x128xf32, #tpu.memory_space<vmem>>, vector<4x128xf32>,
    %c0_i32_20 = arith.constant 0 : i32
    %18 = arith.cmpi eq, %arg1, %c0_i32_20 : i32
    %19 = arith.extui %18 : i1 to i32
    %c0_i32_21 = arith.constant 0 : i32
    %20 = arith.cmpi ne, %19, %c0_i32_21 : i32
    scf.if %20 {
      %c0_22 = arith.constant 0 : index
      %c0_23 = arith.constant 0 : index
      %21 = vector.load %arg5[%c0_22, %c0_23] : memref<4x128xf32, #tpu.memory_space<vmem>>, vector<4x128xf32>
      %cst_24 = arith.constant dense<0.000000e+00> : vector<4xf32>
      %22 = vector.multi_reduction <add>, %21, %cst_24 [1] : vector<4x128xf32> to vector<4xf32>
      %23 = vector.shape_cast %22 : vector<4xf32> to vector<4x1xf32>
      %c0_25 = arith.constant 0 : index
      %c0_26 = arith.constant 0 : index
      %24 = vector.load %arg6[%c0_25, %c0_26] : memref<4x128xf32, #tpu.memory_space<vmem>>, vector<4x128xf32>
      %cst_27 = arith.constant dense<0.000000e+00> : vector<4xf32>
      %25 = vector.multi_reduction <add>, %24, %cst_27 [1] : vector<4x128xf32> to vector<4xf32>
      %26 = vector.shape_cast %25 : vector<4xf32> to vector<4x1xf32>
      %c0_28 = arith.constant 0 : index
      %c0_29 = arith.constant 0 : index
      %27 = vector.load %arg7[%c0_28, %c0_29] : memref<4x128xf32, #tpu.memory_space<vmem>>, vector<4x128xf32>
      %cst_30 = arith.constant dense<0.000000e+00> : vector<4xf32>
      %28 = vector.multi_reduction <add>, %27, %cst_30 [1] : vector<4x128xf32> to vector<4xf32>
      %29 = vector.shape_cast %28 : vector<4xf32> to vector<4x1xf32>
      %cst_31 = arith.constant 2.000000e+00 : f32
      %30 = vector.broadcast %cst_31 : f32 to vector<4x1xf32>
      %31 = arith.mulf %30, %23 : vector<4x1xf32>
      %32 = arith.addf %26, %29 : vector<4x1xf32>
      %33 = arith.divf %31, %32 : vector<4x1xf32>
      %34 = vector.shape_cast %33 : vector<4x1xf32> to vector<1x4x1xf32>
      %c0_32 = arith.constant 0 : index
      %c0_33 = arith.constant 0 : index
      %c0_34 = arith.constant 0 : index
      %35 = vector.load %arg4[%c0_32, %c0_33, %c0_34] : memref<1x4x1xf32, #tpu.memory_space<vmem>>, vector<1x4x1xf32>
      tpu.vector_store %arg4[%c0_32, %c0_33, %c0_34], %34 {strides = array<i32>} : memref<1x4x1xf32, #tpu.memory_space<vmem>>, vector<1x4x1xf32>,
    } else {
    }
    return
  }
  func.func @transform_0(%arg0: i32, %arg1: i32) -> (i32, i32, i32) {
    %c0_i32 = arith.constant 0 : i32
    %c0_i32_0 = arith.constant 0 : i32
    return %arg0, %arg1, %c0_i32 : i32, i32, i32
  }
  func.func @transform_1(%arg0: i32, %arg1: i32) -> (i32, i32, i32) {
    %c0_i32 = arith.constant 0 : i32
    %c0_i32_0 = arith.constant 0 : i32
    return %arg0, %arg1, %c0_i32 : i32, i32, i32
  }
  func.func @transform_2(%arg0: i32, %arg1: i32) -> (i32, i32, i32) {
    %c0_i32 = arith.constant 0 : i32
    %c0_i32_0 = arith.constant 0 : i32
    %c0_i32_1 = arith.constant 0 : i32
    return %arg0, %c0_i32, %c0_i32_0 : i32, i32, i32
  }
}

</mosaic_0001>

<llo_original>
// kernel: tpu_custom_call.1
$region0: #{tpu_custom_call.1}
  #allocation0 [shape = 'u32[]', space=smem, size = 0x4, offset = 0x4, fixed_abs, tag = 'smem constant byte address 0x4 - core index']
  #allocation1 [shape = 'u32[144,128]{1,0:T(1,128)}', space=vmem, size = 0x12000, scoped, tag = 'internal scratch']
  #allocation2 [shape = 'f32[4,128]{1,0:T(4,128)}', space=vmem, size = 0x800, scoped, tag = 'scratch operand']
  #allocation3 [shape = 'f32[4,128]{1,0:T(4,128)}', space=vmem, size = 0x800, scoped, tag = 'scratch operand']
  #allocation4 [shape = 'f32[4,128]{1,0:T(4,128)}', space=vmem, size = 0x800, scoped, tag = 'scratch operand']
  %s0 = inlined_call_operand.hbm [shape: f32[8,8,128], index: 0, kind: input, shape index: {}]
  %s1 = inlined_call_operand.hbm [shape: f32[8,8,128], index: 1, kind: input, shape index: {}]
  %s2 = inlined_call_operand.vmem [shape: f32[2,4,1], index: 2, kind: output, shape index: {}]
  %s3 = sld [smem:[#allocation0]]
  $region57: #{tpu_custom_call.1} parent=0
    _
  %s5 = ssub.s32 1, %s3
  %s6 = scalar_select 0, %s5, %s3
  $region1: #{tpu_custom_call.1} parent=0
    #allocation5 [shape = 'u8[32768]{0}', space=vmem, size = 0x8000, scoped, tag = 'input window, operand 0']
    #allocation6 [shape = 's32[2]{0}', space=sflag, size = 0x8, scoped, tag = 'scoped memory for tpu_custom_call.1']
    #allocation7 [shape = 'u8[32768]{0}', space=vmem, size = 0x8000, scoped, tag = 'input window, operand 1']
    #allocation8 [shape = 's32[2]{0}', space=sflag, size = 0x8, scoped, tag = 'scoped memory for tpu_custom_call.1']
    %7 = vsyncpa [#allocation6], 0
    %s8 = scalar_lea.sflag [#allocation6], 1
    %9 = vsyncpa %s8, 0
    %10 = vsyncpa [#allocation8], 0
    %s11 = scalar_lea.sflag [#allocation8], 1
    %12 = vsyncpa %s11, 0
    loop: start=0, step=1, limit=4
    $region2: #{tpu_custom_call.1} parent=1 // loop_pre_header
      _
    $region3: #{tpu_custom_call.1} parent=1 // loop_header
      %s14 = sphi 0, %s18
      %p15 = scmp.ge.s32.totalorder %s14, 4
      %s21 = sphi 0, %s33
      %s22 = sphi 0, %s29
      %s23 = sphi 0, %s21
      %s24 = sphi 0, %s22
      %s25 = sphi 0, %s23
      %s26 = sphi 0, %s24
      %s38 = sphi 0, %s40
      %s41 = sphi 0, %s38
      %s42 = sphi 0, %s41
      %s58 = sphi 0, %s42
      %s66 = sphi 0, %s68
      %s69 = sphi 0, %s66
      %s70 = sphi 0, %s69
      %s86 = sphi 0, %s70
      %s92 = sphi 0, %s94
      %s95 = sphi 0, %s92
      %s96 = sphi 0, %s95
      %s112 = sphi 0, %s96
    $region4: #{tpu_custom_call.1} parent=1 // loop_header_branch
      %17 = sbr.rel (%p15) target = $region8
    $region5: #{tpu_custom_call.1} parent=1 // loop_body
      %s19 = ssub.s32 %s14, 1
      %s20 = ssub.s32 %s14, 2
      %s27 = sadd.s32 1, %s22
      %p28 = scmp.ge.s32.totalorder %s27, 1
      %s29 = scalar_select %p28, 0, %s27
      %s30 = sadd.s32 1, %s21
      %s31 = scalar_select %p28, %s30, %s21
      %p32 = scmp.ge.s32.totalorder %s31, 2
      %s33 = scalar_select %p32, 0, %s31
      %s34 = ssub.s32 %s21, %s33
      %s35 = ssub.s32 %s22, %s29
      %s36 = sor.u32 %s34, %s35
      %p37 = scmp.eq.s32.totalorder %s36, 0
      %s39 = sadd.s32 %s38, 1
      %s40 = scalar_select %p37, %s38, %s39
      %p43 = pneg %p37
      %p44 = scmp.eq.s32.totalorder %s14, 1
      %p45 = por %p43, %p44
      %p46 = scmp.ne.s32.totalorder %s38, %s41
      %p47 = scmp.eq.s32.totalorder %s14, 0
      %p48 = por %p46, %p47
      %p49 = scmp.ne.s32.totalorder %s38, %s41
      %p50 = scmp.eq.s32.totalorder %s19, 1
      %p51 = por %p49, %p50
      %p52 = scmp.ne.s32.totalorder %s41, %s42
      %p53 = scmp.eq.s32.totalorder %s19, 0
      %p54 = por %p52, %p53
      %p55 = scmp.ne.s32.totalorder %s41, %s42
      %p56 = scmp.eq.s32.totalorder %s20, 1
      %p57 = por %p55, %p56
      %p59 = scmp.ne.s32.totalorder %s42, %s58
      %p60 = scmp.eq.s32.totalorder %s20, 0
      %p61 = por %p59, %p60
      %s62 = ssub.s32 %s21, %s33
      %s63 = ssub.s32 %s22, %s29
      %s64 = sor.u32 %s62, %s63
      %p65 = scmp.eq.s32.totalorder %s64, 0
      %s67 = sadd.s32 %s66, 1
      %s68 = scalar_select %p65, %s66, %s67
      %p71 = pneg %p65
      %p72 = scmp.eq.s32.totalorder %s14, 1
      %p73 = por %p71, %p72
      %p74 = scmp.ne.s32.totalorder %s66, %s69
      %p75 = scmp.eq.s32.totalorder %s14, 0
      %p76 = por %p74, %p75
      %p77 = scmp.ne.s32.totalorder %s66, %s69
      %p78 = scmp.eq.s32.totalorder %s19, 1
      %p79 = por %p77, %p78
      %p80 = scmp.ne.s32.totalorder %s69, %s70
      %p81 = scmp.eq.s32.totalorder %s19, 0
      %p82 = por %p80, %p81
      %p83 = scmp.ne.s32.totalorder %s69, %s70
      %p84 = scmp.eq.s32.totalorder %s20, 1
      %p85 = por %p83, %p84
      %p87 = scmp.ne.s32.totalorder %s70, %s86
      %p88 = scmp.eq.s32.totalorder %s20, 0
      %p89 = por %p87, %p88
      %s90 = ssub.s32 %s21, %s33
      %p91 = scmp.eq.s32.totalorder %s90, 0
      %s93 = sadd.s32 %s92, 1
      %s94 = scalar_select %p91, %s92, %s93
      %p97 = pneg %p91
      %p98 = scmp.eq.s32.totalorder %s14, 1
      %p99 = por %p97, %p98
      %p100 = scmp.ne.s32.totalorder %s92, %s95
      %p101 = scmp.eq.s32.totalorder %s14, 0
      %p102 = por %p100, %p101
      %p103 = scmp.ne.s32.totalorder %s92, %s95
      %p104 = scmp.eq.s32.totalorder %s19, 1
      %p105 = por %p103, %p104
      %p106 = scmp.ne.s32.totalorder %s95, %s96
      %p107 = scmp.eq.s32.totalorder %s19, 0
      %p108 = por %p106, %p107
      %p109 = scmp.ne.s32.totalorder %s95, %s96
      %p110 = scmp.eq.s32.totalorder %s20, 1
      %p111 = por %p109, %p110
      %p113 = scmp.ne.s32.totalorder %s96, %s112
      %p114 = scmp.eq.s32.totalorder %s20, 0
      %p115 = por %p113, %p114
      %p116 = scmp.le.s32.totalorder 1, %s14
      %p117 = scmp.lt.s32.totalorder %s14, 3
      %p118 = pnand %p116, %p117
      %p119 = pneg %p118
      // Predicated region
      $region9: #{tpu_custom_call.1} parent=5 // pred_check
        _
      $region10: #{tpu_custom_call.1} parent=5 // pred_check_branch
        %121 = sbr.rel (%p118) target = $region12
      $region11: #{tpu_custom_call.1} parent=5 // pred_region
        %s122 = ssub.s32 %s14, 1
      $region12: #{tpu_custom_call.1} parent=5 // pred_fallthru
        _
      %p123 = scmp.lt.s32.totalorder %s14, 2
      // Predicated region
      $region13: #{tpu_custom_call.1} parent=5 // pred_check
        %p124 = pneg %p123
      $region14: #{tpu_custom_call.1} parent=5 // pred_check_branch
        %126 = sbr.rel (%p124) target = $region16
      $region15: #{tpu_custom_call.1} parent=5 // pred_region
        // Predicated region
        $region17: #{tpu_custom_call.1} parent=15 // pred_check
          %p127 = pneg %p48
        $region18: #{tpu_custom_call.1} parent=15 // pred_check_branch
          %129 = sbr.rel (%p127) target = $region20
        $region19: #{tpu_custom_call.1} parent=15 // pred_region
          %s130 = sand.u32 %s38, 1
          %s131 = scalar_lea.sflag [#allocation6], %s130
          %s132 = sand.u32 %s38, 1
          %s133 = smul.addr %s132, 32
          %s134 = scalar_lea.vmem [#allocation5], %s133
          %s135 = smul.u32 4, %s21
          %s137 = ssub.s32 512, 512
          %138 = vsyncadd %s131, %s137
          %s139 = sadd.s32 %s22, %s135
          %s140 = smul.addr %s139, 128
          %s141 = scalar_lea.hbm %s0, %s140
          %s142 = sshll.u32 %s134, 4
          %s143 = int_to_ptr.vmem [resolvable:$true] %s142
          %148 = dma.hbm_to_vmem [thread:$0]  %s141, 512, %s143, %s131, 128, 128, 8
        $region20: #{tpu_custom_call.1} parent=15 // pred_fallthru
          _
        // Predicated region
        $region21: #{tpu_custom_call.1} parent=15 // pred_check
          %p149 = pneg %p76
        $region22: #{tpu_custom_call.1} parent=15 // pred_check_branch
          %151 = sbr.rel (%p149) target = $region24
        $region23: #{tpu_custom_call.1} parent=15 // pred_region
          %s152 = sand.u32 %s66, 1
          %s153 = scalar_lea.sflag [#allocation8], %s152
          %s154 = sand.u32 %s66, 1
          %s155 = smul.addr %s154, 32
          %s156 = scalar_lea.vmem [#allocation7], %s155
          %s157 = smul.u32 4, %s21
          %s159 = ssub.s32 512, 512
          %160 = vsyncadd %s153, %s159
          %s161 = sadd.s32 %s22, %s157
          %s162 = smul.addr %s161, 128
          %s163 = scalar_lea.hbm %s1, %s162
          %s164 = sshll.u32 %s156, 4
          %s165 = int_to_ptr.vmem [resolvable:$true] %s164
          %170 = dma.hbm_to_vmem [thread:$0]  %s163, 512, %s165, %s153, 128, 128, 8
        $region24: #{tpu_custom_call.1} parent=15 // pred_fallthru
          _
      $region16: #{tpu_custom_call.1} parent=5 // pred_fallthru
        _
      %p171 = scmp.le.s32.totalorder 1, %s14
      %p172 = scmp.lt.s32.totalorder %s14, 3
      %p173 = pnand %p171, %p172
      %p174 = pneg %p173
      // Predicated region
      $region25: #{tpu_custom_call.1} parent=5 // pred_check
        _
      $region26: #{tpu_custom_call.1} parent=5 // pred_check_branch
        %176 = sbr.rel (%p173) target = $region28
      $region27: #{tpu_custom_call.1} parent=5 // pred_region
        %s177 = ssub.s32 %s14, 1
        %s178 = sand.u32 %s41, 1
        %s179 = scalar_lea.sflag [#allocation6], %s178
        %s180 = sand.u32 %s41, 1
        %s181 = smul.addr %s180, 32
        %s182 = scalar_lea.vmem [#allocation5], %s181
        // Predicated region
        $region29: #{tpu_custom_call.1} parent=27 // pred_check
          %p183 = pneg %p54
        $region30: #{tpu_custom_call.1} parent=27 // pred_check_branch
          %185 = sbr.rel (%p183) target = $region32
        $region31: #{tpu_custom_call.1} parent=27 // pred_region
          %186 = dma.done %s179, 512
        $region32: #{tpu_custom_call.1} parent=27 // pred_fallthru
          _
        %s187 = sand.u32 %s69, 1
        %s188 = scalar_lea.sflag [#allocation8], %s187
        %s189 = sand.u32 %s69, 1
        %s190 = smul.addr %s189, 32
        %s191 = scalar_lea.vmem [#allocation7], %s190
        // Predicated region
        $region33: #{tpu_custom_call.1} parent=27 // pred_check
          %p192 = pneg %p82
        $region34: #{tpu_custom_call.1} parent=27 // pred_check_branch
          %194 = sbr.rel (%p192) target = $region36
        $region35: #{tpu_custom_call.1} parent=27 // pred_region
          %195 = dma.done %s188, 512
        $region36: #{tpu_custom_call.1} parent=27 // pred_fallthru
          _
        %s196 = sand.u32 %s41, 1
        %s197 = scalar_lea.sflag [#allocation6], %s196
        %s198 = sand.u32 %s41, 1
        %s199 = smul.addr %s198, 32
        %s200 = scalar_lea.vmem [#allocation5], %s199
        %p201 = pneg %p54
        %p202 = pneg %p51
        %s203 = sand.u32 %s69, 1
        %s204 = scalar_lea.sflag [#allocation8], %s203
        %s205 = sand.u32 %s69, 1
        %s206 = smul.addr %s205, 32
        %s207 = scalar_lea.vmem [#allocation7], %s206
        %p208 = pneg %p82
        %p209 = pneg %p79
        %p210 = pneg %p108
        %p211 = pneg %p105
        %p212 = scmp.lt.s32.totalorder %s23, 1
        %s213 = scalar_select %p212, %s23, 1
        %s214 = smul.addr %s213, 4
        %s215 = scalar_lea.vmem %s2, %s214
        %s216 = smul.u32 4, %s23
        %s217 = smul.u32 4, %s23
        %p218 = scmp.lt.s32.totalorder %s23, 1
        %s219 = scalar_select %p218, %s23, 1
        %s220 = smul.addr %s219, 4
        %s221 = scalar_lea.vmem %s2, %s220
        %p222 = scmp.eq.s32.totalorder %s24, 0
        // Predicated region
        $region37: #{tpu_custom_call.1} parent=27 // pred_check
          %p223 = pneg %p222
        $region38: #{tpu_custom_call.1} parent=27 // pred_check_branch
          %225 = sbr.rel (%p223) target = $region40
        $region39: #{tpu_custom_call.1} parent=27 // pred_region
          %226 = vst [vmem:[#allocation2] sm:$0xf] 0.0
          %227 = vst [vmem:[#allocation3] sm:$0xf] 0.0
          %228 = vst [vmem:[#allocation4] sm:$0xf] 0.0
        $region40: #{tpu_custom_call.1} parent=27 // pred_fallthru
          _
        %v229 = vld [vmem:[%s182] sm:$0xff]
        %v230 = vld [vmem:[%s182 + $0x8] sm:$0xff]
        %v231 = vld [vmem:[%s182 + $0x10] sm:$0xff]
        %v232 = vld [vmem:[%s182 + $0x18] sm:$0xff]
        %v233 = vld [vmem:[%s191] sm:$0xff]
        %v234 = vld [vmem:[%s191 + $0x8] sm:$0xff]
        %v235 = vld [vmem:[%s191 + $0x10] sm:$0xff]
        %v236 = vld [vmem:[%s191 + $0x18] sm:$0xff]
        %v237 = vld [vmem:[#allocation2] sm:$0xf]
        %v238 = vmul.f32 %v229, %v233
        %v239 = vmul.f32 %v230, %v234
        %v240 = vmul.f32 %v231, %v235
        %v241 = vmul.f32 %v232, %v236
        %v242 = vrot.slane %v238, 4
        %v243 = vadd.f32 %v238, %v242
        %v244 = vrot.slane %v243, 2
        %v245 = vadd.f32 %v243, %v244
        %v246 = vrot.slane %v245, 1
        %v247 = vadd.f32 %v245, %v246
        %v248 = vrot.slane %v239, 4
        %v249 = vadd.f32 %v239, %v248
        %v250 = vrot.slane %v249, 2
        %v251 = vadd.f32 %v249, %v250
        %v252 = vrot.slane %v251, 1
        %v253 = vadd.f32 %v251, %v252
        %v254 = vrot.slane %v240, 4
        %v255 = vadd.f32 %v240, %v254
        %v256 = vrot.slane %v255, 2
        %v257 = vadd.f32 %v255, %v256
        %v258 = vrot.slane %v257, 1
        %v259 = vadd.f32 %v257, %v258
        %v260 = vrot.slane %v241, 4
        %v261 = vadd.f32 %v241, %v260
        %v262 = vrot.slane %v261, 2
        %v263 = vadd.f32 %v261, %v262
        %v264 = vrot.slane %v263, 1
        %v265 = vadd.f32 %v263, %v264
        %vm270 = vcmask 1041409
        %v271 = vsel %vm270, %v253, %v247
        %vm272 = vcmask 1042434
        %v273 = vsel %vm272, %v259, %v271
        %vm274 = vcmask 1043459
        %v275 = vsel %vm274, %v265, %v273
        %v277 = vadd.f32 %v237, %v275
        %278 = vst [vmem:[#allocation2] sm:$0xf] %v277
        %v279 = vld [vmem:[#allocation3] sm:$0xf]
        %v280 = vrot.slane %v229, 4
        %v281 = vadd.f32 %v229, %v280
        %v282 = vrot.slane %v281, 2
        %v283 = vadd.f32 %v281, %v282
        %v284 = vrot.slane %v283, 1
        %v285 = vadd.f32 %v283, %v284
        %v286 = vrot.slane %v230, 4
        %v287 = vadd.f32 %v230, %v286
        %v288 = vrot.slane %v287, 2
        %v289 = vadd.f32 %v287, %v288
        %v290 = vrot.slane %v289, 1
        %v291 = vadd.f32 %v289, %v290
        %v292 = vrot.slane %v231, 4
        %v293 = vadd.f32 %v231, %v292
        %v294 = vrot.slane %v293, 2
        %v295 = vadd.f32 %v293, %v294
        %v296 = vrot.slane %v295, 1
        %v297 = vadd.f32 %v295, %v296
        %v298 = vrot.slane %v232, 4
        %v299 = vadd.f32 %v232, %v298
        %v300 = vrot.slane %v299, 2
        %v301 = vadd.f32 %v299, %v300
        %v302 = vrot.slane %v301, 1
        %v303 = vadd.f32 %v301, %v302
        %v308 = vsel %vm270, %v291, %v285
        %v309 = vsel %vm272, %v297, %v308
        %v310 = vsel %vm274, %v303, %v309
        %v312 = vadd.f32 %v279, %v310
        %313 = vst [vmem:[#allocation3] sm:$0xf] %v312
        %v314 = vld [vmem:[#allocation4] sm:$0xf]
        %v315 = vrot.slane %v233, 4
        %v316 = vadd.f32 %v233, %v315
        %v317 = vrot.slane %v316, 2
        %v318 = vadd.f32 %v316, %v317
        %v319 = vrot.slane %v318, 1
        %v320 = vadd.f32 %v318, %v319
        %v321 = vrot.slane %v234, 4
        %v322 = vadd.f32 %v234, %v321
        %v323 = vrot.slane %v322, 2
        %v324 = vadd.f32 %v322, %v323
        %v325 = vrot.slane %v324, 1
        %v326 = vadd.f32 %v324, %v325
        %v327 = vrot.slane %v235, 4
        %v328 = vadd.f32 %v235, %v327
        %v329 = vrot.slane %v328, 2
        %v330 = vadd.f32 %v328, %v329
        %v331 = vrot.slane %v330, 1
        %v332 = vadd.f32 %v330, %v331
        %v333 = vrot.slane %v236, 4
        %v334 = vadd.f32 %v236, %v333
        %v335 = vrot.slane %v334, 2
        %v336 = vadd.f32 %v334, %v335
        %v337 = vrot.slane %v336, 1
        %v338 = vadd.f32 %v336, %v337
        %v343 = vsel %vm270, %v326, %v320
        %v344 = vsel %vm272, %v332, %v343
        %v345 = vsel %vm274, %v338, %v344
        %v347 = vadd.f32 %v314, %v345
        %348 = vst [vmem:[#allocation4] sm:$0xf] %v347
        // Predicated region
        $region41: #{tpu_custom_call.1} parent=27 // pred_check
          %p349 = pneg %p222
        $region42: #{tpu_custom_call.1} parent=27 // pred_check_branch
          %351 = sbr.rel (%p349) target = $region44
        $region43: #{tpu_custom_call.1} parent=27 // pred_region
          %v352 = vld [vmem:[#allocation2] sm:$0xf]
          %vm353 = vcmask 1043456
          %v354 = vsel %vm353, %v352, 0.0
          %355 = vadd.xlane.f32.xlu0 %v354
          %v356 = vpop.xlane.xlu0 %355
          %v357 = vld [vmem:[#allocation3] sm:$0xf]
          %v358 = vsel %vm353, %v357, 0.0
          %359 = vadd.xlane.f32.xlu0 %v358
          %v360 = vpop.xlane.xlu0 %359
          %v361 = vld [vmem:[#allocation4] sm:$0xf]
          %v362 = vsel %vm353, %v361, 0.0
          %363 = vadd.xlane.f32.xlu0 %v362
          %v364 = vpop.xlane.xlu0 %363
          %v365 = vmul.f32 %v356, 2.0
          %v366 = vadd.f32 %v360, %v364
          %v367 = vrcp.pop %v366
          %v368 = vmul.f32 %v365, %v367
          %vm369 = vcmask 3072
          %370 = vst.msk [vmem:[%s221] sm:$0xf] %vm369, %v368
        $region44: #{tpu_custom_call.1} parent=27 // pred_fallthru
          _
        %p371 = scmp.lt.s32.totalorder %s23, 1
        %s372 = scalar_select %p371, %s23, 1
        %s373 = smul.addr %s372, 4
        %s374 = scalar_lea.vmem %s2, %s373
        // Predicated region
        $region45: #{tpu_custom_call.1} parent=27 // pred_check
          %p375 = pneg %p105
        $region46: #{tpu_custom_call.1} parent=27 // pred_check_branch
          %377 = sbr.rel (%p375) target = $region48
        $region47: #{tpu_custom_call.1} parent=27 // pred_region
          _
        $region48: #{tpu_custom_call.1} parent=27 // pred_fallthru
          _
      $region28: #{tpu_custom_call.1} parent=5 // pred_fallthru
        _
      %p378 = scmp.le.s32.totalorder 2, %s14
      // Predicated region
      $region49: #{tpu_custom_call.1} parent=5 // pred_check
        %p379 = pneg %p378
      $region50: #{tpu_custom_call.1} parent=5 // pred_check_branch
        %381 = sbr.rel (%p379) target = $region52
      $region51: #{tpu_custom_call.1} parent=5 // pred_region
        %s382 = ssub.s32 %s14, 2
        // Predicated region
        $region53: #{tpu_custom_call.1} parent=51 // pred_check
          %p383 = pneg %p111
        $region54: #{tpu_custom_call.1} parent=51 // pred_check_branch
          %385 = sbr.rel (%p383) target = $region56
        $region55: #{tpu_custom_call.1} parent=51 // pred_region
          %p386 = scmp.lt.s32.totalorder %s25, 1
          %s387 = scalar_select %p386, %s25, 1
          %s388 = smul.addr %s387, 4
          %s389 = scalar_lea.vmem %s2, %s388
        $region56: #{tpu_custom_call.1} parent=51 // pred_fallthru
          _
      $region52: #{tpu_custom_call.1} parent=5 // pred_fallthru
        _
    $region6: #{tpu_custom_call.1} parent=1 // loop_footer
      %s18 = sadd.s32 1, %s14
    $region7: #{tpu_custom_call.1} parent=1 // loop_footer_branch
      %13 = sbr.rel target = $region3
    $region8: #{tpu_custom_call.1} parent=1 // loop_exit
      _
    %390 = vsyncpa [#allocation6], 1
    %s391 = scalar_lea.sflag [#allocation6], 1
    %392 = vsyncpa %s391, 1
    %393 = vsyncpa [#allocation8], 1
    %s394 = scalar_lea.sflag [#allocation8], 1
    %395 = vsyncpa %s394, 1

</llo_original>
